<compile_context>
chip_gen: v7x
topology: tpu7x:2x2x1
jax: 0.10.0
libtpu: 0.0.40
codegen_flags: <defaults>
</compile_context>

<pallas_src>
import jax
import jax.numpy as jnp
from jax.experimental import pallas as pl
from jax.experimental.pallas import tpu as pltpu

K_IN = 6        # logical flattened input features
K_PAD = 8       # contraction dim padded to sublane granule
HIDDEN = 512
N_OUT = 3       # logical output features
N_PAD = 128     # lane-dense padded output width


def _round_up(x, m):
    return ((x + m - 1) // m) * m


def mlp_kernel(x_ref, w1_ref, b1_ref, w2_ref, b2_ref, w3_ref, b3_ref, o_ref):
    # x:  (TB, 8)    bf16
    # w1: (8, 512)   bf16   b1: (1, 512) f32
    # w2: (512, 512) bf16   b2: (1, 512) f32
    # w3: (512, 128) bf16 (cols 3..127 are zero)   b3: (1, 128) f32
    x = x_ref[...]
    h1 = jnp.dot(x, w1_ref[...], preferred_element_type=jnp.float32) + b1_ref[...]
    h1 = jnp.maximum(h1, 0.0)            # ReLU; Dropout = identity (eval mode)
    h2 = jnp.dot(h1.astype(jnp.bfloat16), w2_ref[...],
                 preferred_element_type=jnp.float32) + b2_ref[...]
    h2 = jnp.maximum(h2, 0.0)            # ReLU; Dropout = identity (eval mode)
    logits = jnp.dot(h2.astype(jnp.bfloat16), w3_ref[...],
                     preferred_element_type=jnp.float32) + b3_ref[...]
    o_ref[...] = logits.astype(o_ref.dtype)


def neural_network_forward(x, params, *, tb=1024):
    """x: (B, *) tensor whose trailing dims flatten to 6. Returns (B, 3) f32 logits."""
    B = x.shape[0]
    x2d = x.reshape(B, -1).astype(jnp.float32)          # nn.Flatten
    assert x2d.shape[1] == K_IN, "flattened feature dim must be 6"

    w1, b1, w2, b2, w3, b3 = params

    # Pad contraction dim 6 -> 8 and output dim 3 -> 128; cast MXU operands to bf16.
    x_pad = jnp.pad(x2d, ((0, 0), (0, K_PAD - K_IN)))
    w1p = jnp.pad(w1, ((0, K_PAD - K_IN), (0, 0))).astype(jnp.bfloat16)
    w2b = w2.astype(jnp.bfloat16)
    w3p = jnp.pad(w3, ((0, 0), (0, N_PAD - N_OUT))).astype(jnp.bfloat16)
    b3p = jnp.pad(b3, ((0, 0), (0, N_PAD - N_OUT))).astype(jnp.float32)
    b1f = b1.astype(jnp.float32)
    b2f = b2.astype(jnp.float32)

    # Batch tiling: TB multiple of 8, batch padded up to a multiple of TB.
    TB = min(tb, _round_up(B, 8))
    Bpad = _round_up(B, TB)
    x_pad = jnp.pad(x_pad, ((0, Bpad - B), (0, 0))).astype(jnp.bfloat16)
    grid = (Bpad // TB,)

    full = lambda i: (0, 0)   # weights/biases: same block every step (VMEM-resident)
    tile = lambda i: (i, 0)   # batch-tiled x / out

    cost = pl.CostEstimate(
        flops=2 * B * (K_IN * HIDDEN + HIDDEN * HIDDEN + HIDDEN * N_OUT),
        transcendentals=0,
        bytes_accessed=(Bpad * K_PAD * 2 + Bpad * N_PAD * 4
                        + (K_PAD * HIDDEN + HIDDEN * HIDDEN + HIDDEN * N_PAD) * 2
                        + (2 * HIDDEN + N_PAD) * 4),
    )

    out = pl.pallas_call(
        mlp_kernel,
        out_shape=jax.ShapeDtypeStruct((Bpad, N_PAD), jnp.float32),
        grid_spec=pltpu.PrefetchScalarGridSpec(
            num_scalar_prefetch=0,
            grid=grid,
            in_specs=[
                pl.BlockSpec((TB, K_PAD), tile),          # x
                pl.BlockSpec((K_PAD, HIDDEN), full),      # w1
                pl.BlockSpec((1, HIDDEN), full),          # b1
                pl.BlockSpec((HIDDEN, HIDDEN), full),     # w2
                pl.BlockSpec((1, HIDDEN), full),          # b2
                pl.BlockSpec((HIDDEN, N_PAD), full),      # w3 (padded)
                pl.BlockSpec((1, N_PAD), full),           # b3 (padded)
            ],
            out_specs=pl.BlockSpec((TB, N_PAD), tile),
        ),
        compiler_params=pltpu.CompilerParams(
            dimension_semantics=("parallel",),
            vmem_limit_bytes=32 * 1024 * 1024,
        ),
        cost_estimate=cost,
    )(x_pad, w1p, b1f, w2b, b2f, w3p, b3p)

    return out[:B, :N_OUT]


def init_params(key):
    """PyTorch-style nn.Linear init (uniform +-1/sqrt(fan_in)).
    Weights stored as (in_features, out_features) so the kernel does x @ W + b."""
    def linear(k, fan_in, fan_out):
        kw, kb = jax.random.split(k)
        bound = 1.0 / jnp.sqrt(float(fan_in))
        w = jax.random.uniform(kw, (fan_in, fan_out), jnp.float32, -bound, bound)
        b = jax.random.uniform(kb, (1, fan_out), jnp.float32, -bound, bound)
        return w, b

    k1, k2, k3 = jax.random.split(key, 3)
    w1, b1 = linear(k1, K_IN, HIDDEN)
    w2, b2 = linear(k2, HIDDEN, HIDDEN)
    w3, b3 = linear(k3, HIDDEN, N_OUT)
    return (w1, b1, w2, b2, w3, b3)


if __name__ == "__main__":
    key = jax.random.PRNGKey(0)
    k_params, k_x = jax.random.split(key)

    params = init_params(k_params)
    # Small example input: batch=8, flattens to (8, 6).
    x = jax.random.normal(k_x, (8, 2, 3), dtype=jnp.float32)

    logits = neural_network_forward(x, params)
    jax.block_until_ready(logits)
    assert logits.shape == (8, 3)

    # Reference in plain JAX (eval-mode dropout == identity), f32.
    # Kernel uses bf16 MXU operands with f32 accumulation -> loose tolerance.
    w1, b1, w2, b2, w3, b3 = params
    xf = x.reshape(x.shape[0], -1)
    ref = jnp.maximum(xf @ w1 + b1, 0.0)
    ref = jnp.maximum(ref @ w2 + b2, 0.0)
    ref = ref @ w3 + b3
    assert jnp.allclose(logits, ref, atol=5e-2, rtol=5e-2), (
        f"max abs err {jnp.max(jnp.abs(logits - ref))}")

    print("KERNEL_OK")
</pallas_src>

<mosaic_0001>
module attributes {stable_mosaic.version = 11 : i64} {
  func.func @mlp_kernel(%arg0: i32, %arg1: memref<8x8xbf16, #tpu.memory_space<vmem>>, %arg2: memref<8x512xbf16, #tpu.memory_space<vmem>>, %arg3: memref<1x512xf32, #tpu.memory_space<vmem>>, %arg4: memref<512x512xbf16, #tpu.memory_space<vmem>>, %arg5: memref<1x512xf32, #tpu.memory_space<vmem>>, %arg6: memref<512x128xbf16, #tpu.memory_space<vmem>>, %arg7: memref<1x128xf32, #tpu.memory_space<vmem>>, %arg8: memref<8x128xf32, #tpu.memory_space<vmem>>) attributes {dimension_semantics = [#tpu.dimension_semantics<parallel>], iteration_bounds = array<i64: 1>, scalar_prefetch = 0 : i64, scratch_operands = 0 : i64, tpu.core_type = #tpu.core_type<tc>, window_params = [{transform_indices = @transform_0, window_bounds = array<i64: 8, 8>}, {pipeline_mode = #tpu.pipeline_mode<synchronous>, transform_indices = @transform_1, window_bounds = array<i64: 8, 512>}, {pipeline_mode = #tpu.pipeline_mode<synchronous>, transform_indices = @transform_2, window_bounds = array<i64: 1, 512>}, {pipeline_mode = #tpu.pipeline_mode<synchronous>, transform_indices = @transform_3, window_bounds = array<i64: 512, 512>}, {pipeline_mode = #tpu.pipeline_mode<synchronous>, transform_indices = @transform_4, window_bounds = array<i64: 1, 512>}, {pipeline_mode = #tpu.pipeline_mode<synchronous>, transform_indices = @transform_5, window_bounds = array<i64: 512, 128>}, {pipeline_mode = #tpu.pipeline_mode<synchronous>, transform_indices = @transform_6, window_bounds = array<i64: 1, 128>}, {transform_indices = @transform_7, window_bounds = array<i64: 8, 128>}]} {
    %c0 = arith.constant 0 : index
    %c0_0 = arith.constant 0 : index
    %0 = vector.load %arg1[%c0, %c0_0] : memref<8x8xbf16, #tpu.memory_space<vmem>>, vector<8x8xbf16>
    %c0_1 = arith.constant 0 : index
    %c0_2 = arith.constant 0 : index
    %1 = vector.load %arg2[%c0_1, %c0_2] : memref<8x512xbf16, #tpu.memory_space<vmem>>, vector<8x512xbf16>
    %cst = arith.constant dense<0.000000e+00> : vector<8x512xf32>
    %2 = tpu.matmul %0, %1, %cst {dimension_numbers = #tpu.dot_dimension_numbers<[1], [0], [0], [1], [0, 0, 1, 1], [], []>} : vector<8x8xbf16>, vector<8x512xbf16>, vector<8x512xf32> -> vector<8x512xf32>
    %c0_3 = arith.constant 0 : index
    %c0_4 = arith.constant 0 : index
    %3 = vector.load %arg3[%c0_3, %c0_4] : memref<1x512xf32, #tpu.memory_space<vmem>>, vector<1x512xf32>
    %4 = vector.broadcast %3 : vector<1x512xf32> to vector<8x512xf32>
    %5 = arith.addf %2, %4 : vector<8x512xf32>
    %cst_5 = arith.constant 0.000000e+00 : f32
    %6 = vector.broadcast %cst_5 : f32 to vector<8x512xf32>
    %7 = arith.maximumf %5, %6 : vector<8x512xf32>
    %8 = arith.truncf %7 : vector<8x512xf32> to vector<8x512xbf16>
    %c0_6 = arith.constant 0 : index
    %c0_7 = arith.constant 0 : index
    %9 = vector.load %arg4[%c0_6, %c0_7] : memref<512x512xbf16, #tpu.memory_space<vmem>>, vector<512x512xbf16>
    %cst_8 = arith.constant dense<0.000000e+00> : vector<8x512xf32>
    %10 = tpu.matmul %8, %9, %cst_8 {dimension_numbers = #tpu.dot_dimension_numbers<[1], [0], [0], [1], [0, 0, 1, 1], [], []>} : vector<8x512xbf16>, vector<512x512xbf16>, vector<8x512xf32> -> vector<8x512xf32>
    %c0_9 = arith.constant 0 : index
    %c0_10 = arith.constant 0 : index
    %11 = vector.load %arg5[%c0_9, %c0_10] : memref<1x512xf32, #tpu.memory_space<vmem>>, vector<1x512xf32>
    %12 = vector.broadcast %11 : vector<1x512xf32> to vector<8x512xf32>
    %13 = arith.addf %10, %12 : vector<8x512xf32>
    %cst_11 = arith.constant 0.000000e+00 : f32
    %14 = vector.broadcast %cst_11 : f32 to vector<8x512xf32>
    %15 = arith.maximumf %13, %14 : vector<8x512xf32>
    %16 = arith.truncf %15 : vector<8x512xf32> to vector<8x512xbf16>
    %c0_12 = arith.constant 0 : index
    %c0_13 = arith.constant 0 : index
    %17 = vector.load %arg6[%c0_12, %c0_13] : memref<512x128xbf16, #tpu.memory_space<vmem>>, vector<512x128xbf16>
    %cst_14 = arith.constant dense<0.000000e+00> : vector<8x128xf32>
    %18 = tpu.matmul %16, %17, %cst_14 {dimension_numbers = #tpu.dot_dimension_numbers<[1], [0], [0], [1], [0, 0, 1, 1], [], []>} : vector<8x512xbf16>, vector<512x128xbf16>, vector<8x128xf32> -> vector<8x128xf32>
    %c0_15 = arith.constant 0 : index
    %c0_16 = arith.constant 0 : index
    %19 = vector.load %arg7[%c0_15, %c0_16] : memref<1x128xf32, #tpu.memory_space<vmem>>, vector<1x128xf32>
    %20 = vector.broadcast %19 : vector<1x128xf32> to vector<8x128xf32>
    %21 = arith.addf %18, %20 : vector<8x128xf32>
    %c0_17 = arith.constant 0 : index
    %c0_18 = arith.constant 0 : index
    %22 = vector.load %arg8[%c0_17, %c0_18] : memref<8x128xf32, #tpu.memory_space<vmem>>, vector<8x128xf32>
    tpu.vector_store %arg8[%c0_17, %c0_18], %21 {strides = array<i32>} : memref<8x128xf32, #tpu.memory_space<vmem>>, vector<8x128xf32>,
    return
  }
  func.func @transform_0(%arg0: i32) -> (i32, i32) {
    %c0_i32 = arith.constant 0 : i32
    %c0_i32_0 = arith.constant 0 : i32
    return %arg0, %c0_i32 : i32, i32
  }
  func.func @transform_1(%arg0: i32) -> (i32, i32) {
    %c0_i32 = arith.constant 0 : i32
    %c0_i32_0 = arith.constant 0 : i32
    %c0_i32_1 = arith.constant 0 : i32
    return %c0_i32, %c0_i32_0 : i32, i32
  }
  func.func @transform_2(%arg0: i32) -> (i32, i32) {
    %c0_i32 = arith.constant 0 : i32
    %c0_i32_0 = arith.constant 0 : i32
    %c0_i32_1 = arith.constant 0 : i32
    return %c0_i32, %c0_i32_0 : i32, i32
  }
  func.func @transform_3(%arg0: i32) -> (i32, i32) {
    %c0_i32 = arith.constant 0 : i32
    %c0_i32_0 = arith.constant 0 : i32
    %c0_i32_1 = arith.constant 0 : i32
    return %c0_i32, %c0_i32_0 : i32, i32
  }
  func.func @transform_4(%arg0: i32) -> (i32, i32) {
    %c0_i32 = arith.constant 0 : i32
    %c0_i32_0 = arith.constant 0 : i32
    %c0_i32_1 = arith.constant 0 : i32
    return %c0_i32, %c0_i32_0 : i32, i32
  }
  func.func @transform_5(%arg0: i32) -> (i32, i32) {
    %c0_i32 = arith.constant 0 : i32
    %c0_i32_0 = arith.constant 0 : i32
    %c0_i32_1 = arith.constant 0 : i32
    return %c0_i32, %c0_i32_0 : i32, i32
  }
  func.func @transform_6(%arg0: i32) -> (i32, i32) {
    %c0_i32 = arith.constant 0 : i32
    %c0_i32_0 = arith.constant 0 : i32
    %c0_i32_1 = arith.constant 0 : i32
    return %c0_i32, %c0_i32_0 : i32, i32
  }
  func.func @transform_7(%arg0: i32) -> (i32, i32) {
    %c0_i32 = arith.constant 0 : i32
    %c0_i32_0 = arith.constant 0 : i32
    return %arg0, %c0_i32 : i32, i32
  }
}

</mosaic_0001>

<llo_original>
// kernel: tpu_custom_call.1
$region0: #{tpu_custom_call.1}
  #allocation0 [shape = 'u32[]', space=smem, size = 0x4, offset = 0x4, fixed_abs, tag = 'smem constant byte address 0x4 - core index']
  #allocation1 [shape = 'u32[144,128]{1,0:T(1,128)}', space=vmem, size = 0x12000, scoped, tag = 'internal scratch']
  %s0 = inlined_call_operand.hbm [shape: bf16[8,8], index: 0, kind: input, shape index: {}]
  %s1 = inlined_call_operand.hbm [shape: bf16[8,512], index: 1, kind: input, shape index: {}]
  %s2 = inlined_call_operand.vmem [shape: f32[1,512], index: 2, kind: input, shape index: {}]
  %s3 = inlined_call_operand.hbm [shape: bf16[512,512], index: 3, kind: input, shape index: {}]
  %s4 = inlined_call_operand.vmem [shape: f32[1,512], index: 4, kind: input, shape index: {}]
  %s5 = inlined_call_operand.hbm [shape: bf16[512,128], index: 5, kind: input, shape index: {}]
  %s6 = inlined_call_operand.vmem [shape: f32[1,128], index: 6, kind: input, shape index: {}]
  %s7 = inlined_call_operand.hbm [shape: f32[8,128], index: 7, kind: output, shape index: {}]
  %s8 = sld [smem:[#allocation0]]
  $region54: #{tpu_custom_call.1} parent=0
    _
  %s10 = ssub.s32 1, %s8
  %s11 = scalar_select 0, %s10, %s8
  $region1: #{tpu_custom_call.1} parent=0
    #allocation2 [shape = 'u8[2048]{0}', space=vmem, size = 0x800, scoped, tag = 'input window, operand 0, single buffered']
    #allocation3 [shape = 's32[1]{0}', space=sflag, size = 0x4, scoped, tag = 'scoped memory for tpu_custom_call.1']
    #allocation4 [shape = 's32[1]{0}', space=sflag, size = 0x4, scoped, tag = 'scoped memory for tpu_custom_call.1']
    #allocation5 [shape = 'u8[8192]{0}', space=vmem, size = 0x2000, scoped, tag = 'input window, operand 1, single buffered']
    #allocation6 [shape = 's32[1]{0}', space=sflag, size = 0x4, scoped, tag = 'scoped memory for tpu_custom_call.1']
    #allocation7 [shape = 'u8[524288]{0}', space=vmem, size = 0x80000, scoped, tag = 'input window, operand 3, single buffered']
    #allocation8 [shape = 'u8[131072]{0}', space=vmem, size = 0x20000, scoped, tag = 'input window, operand 5, single buffered']
    #allocation9 [shape = 's32[1]{0}', space=sflag, size = 0x4, scoped, tag = 'scoped memory for tpu_custom_call.1']
    #allocation10 [shape = 'u8[4096]{0}', space=vmem, size = 0x1000, scoped, tag = 'output window, operand 0, single buffered']
    %12 = vsyncpa [#allocation3], 0
    %13 = vsyncpa [#allocation6], 0
    %14 = vsyncpa [#allocation9], 0
    %15 = vsyncpa [#allocation4], 0
    // Predicated region
    $region2: #{tpu_custom_call.1} parent=1 // pred_check
      _
    $region3: #{tpu_custom_call.1} parent=1 // pred_check_branch
      %17 = sbr.rel (0) target = $region5
    $region4: #{tpu_custom_call.1} parent=1 // pred_region
      %s19 = ssub.s32 64, 64
      %20 = vsyncadd [#allocation3], %s19
      %s22 = sshll.u32 [#allocation2], 4
      %s23 = int_to_ptr.vmem [resolvable:$true] %s22
      %25 = dma.hbm_to_vmem [thread:$0]  %s0, 64, %s23, [#allocation3]
    $region5: #{tpu_custom_call.1} parent=1 // pred_fallthru
      _
    // Predicated region
    $region6: #{tpu_custom_call.1} parent=1 // pred_check
      _
    $region7: #{tpu_custom_call.1} parent=1 // pred_check_branch
      %27 = sbr.rel (0) target = $region9
    $region8: #{tpu_custom_call.1} parent=1 // pred_region
      %s29 = ssub.s32 256, 256
      %30 = vsyncadd [#allocation6], %s29
      %s32 = sshll.u32 [#allocation5], 4
      %s33 = int_to_ptr.vmem [resolvable:$true] %s32
      %35 = dma.hbm_to_vmem [thread:$0]  %s1, 256, %s33, [#allocation6]
    $region9: #{tpu_custom_call.1} parent=1 // pred_fallthru
      _
    // Predicated region
    $region10: #{tpu_custom_call.1} parent=1 // pred_check
      _
    $region11: #{tpu_custom_call.1} parent=1 // pred_check_branch
      %37 = sbr.rel (0) target = $region13
    $region12: #{tpu_custom_call.1} parent=1 // pred_region
      _
    $region13: #{tpu_custom_call.1} parent=1 // pred_fallthru
      _
    // Predicated region
    $region14: #{tpu_custom_call.1} parent=1 // pred_check
      _
    $region15: #{tpu_custom_call.1} parent=1 // pred_check_branch
      %39 = sbr.rel (0) target = $region17
    $region16: #{tpu_custom_call.1} parent=1 // pred_region
      %s41 = ssub.s32 16384, 16384
      %42 = vsyncadd [#allocation6], %s41
      %s43 = sshll.u32 [#allocation7], 4
      %s44 = int_to_ptr.vmem [resolvable:$true] %s43
      %49 = dma.hbm_to_vmem [thread:$0]  %s3, 16384, %s44, [#allocation6], 256, 256, 16
    $region17: #{tpu_custom_call.1} parent=1 // pred_fallthru
      _
    // Predicated region
    $region18: #{tpu_custom_call.1} parent=1 // pred_check
      _
    $region19: #{tpu_custom_call.1} parent=1 // pred_check_branch
      %51 = sbr.rel (0) target = $region21
    $region20: #{tpu_custom_call.1} parent=1 // pred_region
      _
    $region21: #{tpu_custom_call.1} parent=1 // pred_fallthru
      _
    // Predicated region
    $region22: #{tpu_custom_call.1} parent=1 // pred_check
      _
    $region23: #{tpu_custom_call.1} parent=1 // pred_check_branch
      %53 = sbr.rel (0) target = $region25
    $region24: #{tpu_custom_call.1} parent=1 // pred_region
      %s55 = ssub.s32 4096, 4096
      %56 = vsyncadd [#allocation9], %s55
      %s57 = sshll.u32 [#allocation8], 4
      %s58 = int_to_ptr.vmem [resolvable:$true] %s57
      %63 = dma.hbm_to_vmem [thread:$0]  %s5, 4096, %s58, [#allocation9], 64, 64, 4
    $region25: #{tpu_custom_call.1} parent=1 // pred_fallthru
      _
    // Predicated region
    $region26: #{tpu_custom_call.1} parent=1 // pred_check
      _
    $region27: #{tpu_custom_call.1} parent=1 // pred_check_branch
      %65 = sbr.rel (0) target = $region29
    $region28: #{tpu_custom_call.1} parent=1 // pred_region
      _
    $region29: #{tpu_custom_call.1} parent=1 // pred_fallthru
      _
    // Predicated region
    $region30: #{tpu_custom_call.1} parent=1 // pred_check
      _
    $region31: #{tpu_custom_call.1} parent=1 // pred_check_branch
      %67 = sbr.rel (0) target = $region33
    $region32: #{tpu_custom_call.1} parent=1 // pred_region
      %68 = dma.done [#allocation3], 64
    $region33: #{tpu_custom_call.1} parent=1 // pred_fallthru
      _
    // Predicated region
    $region34: #{tpu_custom_call.1} parent=1 // pred_check
      _
    $region35: #{tpu_custom_call.1} parent=1 // pred_check_branch
      %70 = sbr.rel (0) target = $region37
    $region36: #{tpu_custom_call.1} parent=1 // pred_region
      %71 = dma.done [#allocation6], 256
    $region37: #{tpu_custom_call.1} parent=1 // pred_fallthru
      _
    // Predicated region
    $region38: #{tpu_custom_call.1} parent=1 // pred_check
      _
    $region39: #{tpu_custom_call.1} parent=1 // pred_check_branch
      %73 = sbr.rel (0) target = $region41
    $region40: #{tpu_custom_call.1} parent=1 // pred_region
      %74 = dma.done [#allocation6], 16384
    $region41: #{tpu_custom_call.1} parent=1 // pred_fallthru
      _
    // Predicated region
    $region42: #{tpu_custom_call.1} parent=1 // pred_check
      _
    $region43: #{tpu_custom_call.1} parent=1 // pred_check_branch
      %76 = sbr.rel (0) target = $region45
    $region44: #{tpu_custom_call.1} parent=1 // pred_region
      %77 = dma.done [#allocation9], 4096
    $region45: #{tpu_custom_call.1} parent=1 // pred_fallthru
      _
    %v79 = vld [vmem:[#allocation2] sm:$0xf]
    %v80 = vld [vmem:[#allocation5] sm:$0xff]
    %v81 = vld [vmem:[#allocation5 + $0x8] sm:$0xff]
    %v82 = vld [vmem:[%s2] sm:$0xf]
    %v84 = vlaneseq
    %v85 = vshrl.u32 %v84, 7
    %v86 = vsub.s32 0, %v85
    %v87 = vrot.slane %v82, %v86
    %v88 = vlaneseq
    %v89 = vshrl.u32 %v88, 7
    %v90 = vsub.s32 1, %v89
    %v91 = vrot.slane %v82, %v90
    %v92 = vlaneseq
    %v93 = vshrl.u32 %v92, 7
    %v94 = vsub.s32 2, %v93
    %v95 = vrot.slane %v82, %v94
    %v96 = vlaneseq
    %v97 = vshrl.u32 %v96, 7
    %v98 = vsub.s32 3, %v97
    %v99 = vrot.slane %v82, %v98
    %v106 = vunpack.c.l.b16 %v80
    %v107 = vunpack.c.h.b16 %v80
    %v108 = vunpack.c.l.b16 %v81
    %v109 = vunpack.c.h.b16 %v81
    %v110 = vpack.c.b16 %v106, %v106
    %v111 = vpack.c.b16 %v107, %v107
    %v112 = vpack.c.b16 %v108, %v108
    %v113 = vpack.c.b16 %v109, %v109
    %vm114 = vcmask 64512
    %v116 = vsel %vm114, %v79, 0
    %vm118 = vcmask 1043456
    %v120 = vsel %vm118, %v110, 0
    %v123 = vsel %vm118, %v111, 0
    %v126 = vsel %vm118, %v112, 0
    %v129 = vsel %vm118, %v113, 0
    %131 = vmatprep.subr.bf16.mxu0 %v123
    %132 = vmatpush1.bf16.msra.mxu0 %v120
    %133 = vmatprep.subr.bf16.mxu0 0
    %134 = vmatpush1.bf16.msra.mxu0 0
    %135 = vmatprep.subr.bf16.mxu0 0
    %136 = vmatpush1.bf16.msra.mxu0 0
    %137 = vmatprep.subr.bf16.mxu0 0
    %138 = vmatpush1.bf16.msra.mxu0 0
    %139 = vmatprep.subr.bf16.mxu0 0
    %140 = vmatpush1.bf16.msra.mxu0 0
    %141 = vmatprep.subr.bf16.mxu0 0
    %142 = vmatpush1.bf16.msra.mxu0 0
    %143 = vmatprep.subr.bf16.mxu0 0
    %144 = vmatpush1.bf16.msra.mxu0 0
    %145 = vmatprep.subr.bf16.mxu0 0
    %146 = vmatpush1.bf16.msra.mxu0 0
    %147 = vmatprep.subr.bf16.mxu0 0
    %148 = vmatpush1.bf16.msra.mxu0 0
    %149 = vmatprep.subr.bf16.mxu0 0
    %150 = vmatpush1.bf16.msra.mxu0 0
    %151 = vmatprep.subr.bf16.mxu0 0
    %152 = vmatpush1.bf16.msra.mxu0 0
    %153 = vmatprep.subr.bf16.mxu0 0
    %154 = vmatpush1.bf16.msra.mxu0 0
    %155 = vmatprep.subr.bf16.mxu0 0
    %156 = vmatpush1.bf16.msra.mxu0 0
    %157 = vmatprep.subr.bf16.mxu0 0
    %158 = vmatpush1.bf16.msra.mxu0 0
    %159 = vmatprep.subr.bf16.mxu0 0
    %160 = vmatpush1.bf16.msra.mxu0 0
    %161 = vmatprep.subr.bf16.mxu0 0
    %162 = vmatpush1.bf16.msra.mxu0 0
    %163 = vmatprep.mubr.bf16.mxu0 0
    %164 = vmatmul.mubr.bf16.gmra.mrb[0].mxu0 %v116
    %v165 = vpop.f32.mrb[0].mxu0
    %v166 = vadd.f32 %v87, %v165
    %v167 = vpop.f32.mrb[0].mxu0
    %v168 = vadd.f32 %v91, %v167
    %v169 = vpop.f32.mrb[0].mxu0
    %v170 = vpop.f32.mrb[0].mxu0
    %171 = vdwg.mxu0
    %172 = vmatprep.subr.bf16.mxu0 %v129
    %173 = vmatpush1.bf16.msra.mxu0 %v126
    %174 = vmatprep.subr.bf16.mxu0 0
    %175 = vmatpush1.bf16.msra.mxu0 0
    %176 = vmatprep.subr.bf16.mxu0 0
    %177 = vmatpush1.bf16.msra.mxu0 0
    %178 = vmatprep.subr.bf16.mxu0 0
    %179 = vmatpush1.bf16.msra.mxu0 0
    %180 = vmatprep.subr.bf16.mxu0 0
    %181 = vmatpush1.bf16.msra.mxu0 0
    %182 = vmatprep.subr.bf16.mxu0 0
    %183 = vmatpush1.bf16.msra.mxu0 0
    %184 = vmatprep.subr.bf16.mxu0 0
    %185 = vmatpush1.bf16.msra.mxu0 0
    %186 = vmatprep.subr.bf16.mxu0 0
    %187 = vmatpush1.bf16.msra.mxu0 0
    %188 = vmatprep.subr.bf16.mxu0 0
    %189 = vmatpush1.bf16.msra.mxu0 0
    %190 = vmatprep.subr.bf16.mxu0 0
    %191 = vmatpush1.bf16.msra.mxu0 0
    %192 = vmatprep.subr.bf16.mxu0 0
    %193 = vmatpush1.bf16.msra.mxu0 0
    %194 = vmatprep.subr.bf16.mxu0 0
    %195 = vmatpush1.bf16.msra.mxu0 0
    %196 = vmatprep.subr.bf16.mxu0 0
    %197 = vmatpush1.bf16.msra.mxu0 0
    %198 = vmatprep.subr.bf16.mxu0 0
    %199 = vmatpush1.bf16.msra.mxu0 0
    %200 = vmatprep.subr.bf16.mxu0 0
    %201 = vmatpush1.bf16.msra.mxu0 0
    %202 = vmatprep.subr.bf16.mxu0 0
    %203 = vmatpush1.bf16.msra.mxu0 0
    %204 = vmatprep.mubr.bf16.mxu0 0
    %205 = vmatmul.mubr.bf16.gmra.mrb[0].mxu0 %v116
    %v206 = vpop.f32.mrb[0].mxu0
    %v207 = vadd.f32 %v95, %v206
    %v208 = vpop.f32.mrb[0].mxu0
    %v209 = vadd.f32 %v99, %v208
    %v210 = vpop.f32.mrb[0].mxu0
    %v211 = vpop.f32.mrb[0].mxu0
    %212 = vdwg.mxu0
    %v213 = vmax.f32 %v166, 0.0
    %v214 = vmax.f32 %v168, 0.0
    %v215 = vmax.f32 %v207, 0.0
    %v216 = vmax.f32 %v209, 0.0
    %v217 = vpack.c.bf16 %v213, %v213
    %v218 = vpack.c.bf16 %v214, %v214
    %v219 = vpack.c.bf16 %v215, %v215
    %v220 = vpack.c.bf16 %v216, %v216
    %v221 = vld [vmem:[#allocation7] sm:$0xff]
    %v222 = vld [vmem:[#allocation7 + $0x8] sm:$0xff]
    %v223 = vld [vmem:[#allocation7 + $0x10] sm:$0xff]
    %v224 = vld [vmem:[#allocation7 + $0x18] sm:$0xff]
    %v225 = vld [vmem:[#allocation7 + $0x20] sm:$0xff]
    %v226 = vld [vmem:[#allocation7 + $0x28] sm:$0xff]
    %v227 = vld [vmem:[#allocation7 + $0x30] sm:$0xff]
    %v228 = vld [vmem:[#allocation7 + $0x38] sm:$0xff]
    %v229 = vld [vmem:[#allocation7 + $0x40] sm:$0xff]
    %v230 = vld [vmem:[#allocation7 + $0x48] sm:$0xff]
    %v231 = vld [vmem:[#allocation7 + $0x50] sm:$0xff]
    %v232 = vld [vmem:[#allocation7 + $0x58] sm:$0xff]
    %v233 = vld [vmem:[#allocation7 + $0x60] sm:$0xff]
    %v234 = vld [vmem:[#allocation7 + $0x68] sm:$0xff]
    %v235 = vld [vmem:[#allocation7 + $0x70] sm:$0xff]
    %v236 = vld [vmem:[#allocation7 + $0x78] sm:$0xff]
    %v237 = vld [vmem:[#allocation7 + $0x80] sm:$0xff]
    %v238 = vld [vmem:[#allocation7 + $0x88] sm:$0xff]
    %v239 = vld [vmem:[#allocation7 + $0x90] sm:$0xff]
    %v240 = vld [vmem:[#allocation7 + $0x98] sm:$0xff]
    %v241 = vld [vmem:[#allocation7 + $0xa0] sm:$0xff]
    %v242 = vld [vmem:[#allocation7 + $0xa8] sm:$0xff]
    %v243 = vld [vmem:[#allocation7 + $0xb0] sm:$0xff]
    %v244 = vld [vmem:[#allocation7 + $0xb8] sm:$0xff]
    %v245 = vld [vmem:[#allocation7 + $0xc0] sm:$0xff]
    %v246 = vld [vmem:[#allocation7 + $0xc8] sm:$0xff]
    %v247 = vld [vmem:[#allocation7 + $0xd0] sm:$0xff]
    %v248 = vld [vmem:[#allocation7 + $0xd8] sm:$0xff]
    %v249 = vld [vmem:[#allocation7 + $0xe0] sm:$0xff]
    %v250 = vld [vmem:[#allocation7 + $0xe8] sm:$0xff]
    %v251 = vld [vmem:[#allocation7 + $0xf0] sm:$0xff]
    %v252 = vld [vmem:[#allocation7 + $0xf8] sm:$0xff]
    %v253 = vld [vmem:[#allocation7 + $0x100] sm:$0xff]
    %v254 = vld [vmem:[#allocation7 + $0x108] sm:$0xff]
    %v255 = vld [vmem:[#allocation7 + $0x110] sm:$0xff]
    %v256 = vld [vmem:[#allocation7 + $0x118] sm:$0xff]
    %v257 = vld [vmem:[#allocation7 + $0x120] sm:$0xff]
    %v258 = vld [vmem:[#allocation7 + $0x128] sm:$0xff]
    %v259 = vld [vmem:[#allocation7 + $0x130] sm:$0xff]
    %v260 = vld [vmem:[#allocation7 + $0x138] sm:$0xff]
    %v261 = vld [vmem:[#allocation7 + $0x140] sm:$0xff]
    %v262 = vld [vmem:[#allocation7 + $0x148] sm:$0xff]
    %v263 = vld [vmem:[#allocation7 + $0x150] sm:$0xff]
    %v264 = vld [vmem:[#allocation7 + $0x158] sm:$0xff]
    %v265 = vld [vmem:[#allocation7 + $0x160] sm:$0xff]
    %v266 = vld [vmem:[#allocation7 + $0x168] sm:$0xff]
    %v267 = vld [vmem:[#allocation7 + $0x170] sm:$0xff]
    %v268 = vld [vmem:[#allocation7 + $0x178] sm:$0xff]
    %v269 = vld [vmem:[#allocation7 + $0x180] sm:$0xff]
    %v270 = vld [vmem:[#allocation7 + $0x188] sm:$0xff]
    %v271 = vld [vmem:[#allocation7 + $0x190] sm:$0xff]
    %v272 = vld [vmem:[#allocation7 + $0x198] sm:$0xff]
    %v273 = vld [vmem:[#allocation7 + $0x1a0] sm:$0xff]
    %v274 = vld [vmem:[#allocation7 + $0x1a8] sm:$0xff]
    %v275 = vld [vmem:[#allocation7 + $0x1b0] sm:$0xff]
    %v276 = vld [vmem:[#allocation7 + $0x1b8] sm:$0xff]
    %v277 = vld [vmem:[#allocation7 + $0x1c0] sm:$0xff]
    %v278 = vld [vmem:[#allocation7 + $0x1c8] sm:$0xff]
    %v279 = vld [vmem:[#allocation7 + $0x1d0] sm:$0xff]
    %v280 = vld [vmem:[#allocation7 + $0x1d8] sm:$0xff]
    %v281 = vld [vmem:[#allocation7 + $0x1e0] sm:$0xff]
    %v282 = vld [vmem:[#allocation7 + $0x1e8] sm:$0xff]
    %v283 = vld [vmem:[#allocation7 + $0x1f0] sm:$0xff]
    %v284 = vld [vmem:[#allocation7 + $0x1f8] sm:$0xff]
    %v285 = vld [vmem:[#allocation7 + $0x200] sm:$0xff]
    %v286 = vld [vmem:[#allocation7 + $0x208] sm:$0xff]
    %v287 = vld [vmem:[#allocation7 + $0x210] sm:$0xff]
    %v288 = vld [vmem:[#allocation7 + $0x218] sm:$0xff]
    %v289 = vld [vmem:[#allocation7 + $0x220] sm:$0xff]
    %v290 = vld [vmem:[#allocation7 + $0x228] sm:$0xff]
    %v291 = vld [vmem:[#allocation7 + $0x230] sm:$0xff]
    %v292 = vld [vmem:[#allocation7 + $0x238] sm:$0xff]
    %v293 = vld [vmem:[#allocation7 + $0x240] sm:$0xff]
    %v294 = vld [vmem:[#allocation7 + $0x248] sm:$0xff]
    %v295 = vld [vmem:[#allocation7 + $0x250] sm:$0xff]
    %v296 = vld [vmem:[#allocation7 + $0x258] sm:$0xff]
    %v297 = vld [vmem:[#allocation7 + $0x260] sm:$0xff]
    %v298 = vld [vmem:[#allocation7 + $0x268] sm:$0xff]
    %v299 = vld [vmem:[#allocation7 + $0x270] sm:$0xff]
    %v300 = vld [vmem:[#allocation7 + $0x278] sm:$0xff]
    %v301 = vld [vmem:[#allocation7 + $0x280] sm:$0xff]
    %v302 = vld [vmem:[#allocation7 + $0x288] sm:$0xff]
    %v303 = vld [vmem:[#allocation7 + $0x290] sm:$0xff]
    %v304 = vld [vmem:[#allocation7 + $0x298] sm:$0xff]
    %v305 = vld [vmem:[#allocation7 + $0x2a0] sm:$0xff]
    %v306 = vld [vmem:[#allocation7 + $0x2a8] sm:$0xff]
    %v307 = vld [vmem:[#allocation7 + $0x2b0] sm:$0xff]
    %v308 = vld [vmem:[#allocation7 + $0x2b8] sm:$0xff]
    %v309 = vld [vmem:[#allocation7 + $0x2c0] sm:$0xff]
    %v310 = vld [vmem:[#allocation7 + $0x2c8] sm:$0xff]
    %v311 = vld [vmem:[#allocation7 + $0x2d0] sm:$0xff]
    %v312 = vld [vmem:[#allocation7 + $0x2d8] sm:$0xff]
    %v313 = vld [vmem:[#allocation7 + $0x2e0] sm:$0xff]
    %v314 = vld [vmem:[#allocation7 + $0x2e8] sm:$0xff]
    %v315 = vld [vmem:[#allocation7 + $0x2f0] sm:$0xff]
    %v316 = vld [vmem:[#allocation7 + $0x2f8] sm:$0xff]
    %v317 = vld [vmem:[#allocation7 + $0x300] sm:$0xff]
    %v318 = vld [vmem:[#allocation7 + $0x308] sm:$0xff]
    %v319 = vld [vmem:[#allocation7 + $0x310] sm:$0xff]
    %v320 = vld [vmem:[#allocation7 + $0x318] sm:$0xff]
    %v321 = vld [vmem:[#allocation7 + $0x320] sm:$0xff]
    %v322 = vld [vmem:[#allocation7 + $0x328] sm:$0xff]
    %v323 = vld [vmem:[#allocation7 + $0x330] sm:$0xff]
    %v324 = vld [vmem:[#allocation7 + $0x338] sm:$0xff]
    %v325 = vld [vmem:[#allocation7 + $0x340] sm:$0xff]
    %v326 = vld [vmem:[#allocation7 + $0x348] sm:$0xff]
    %v327 = vld [vmem:[#allocation7 + $0x350] sm:$0xff]
    %v328 = vld [vmem:[#allocation7 + $0x358] sm:$0xff]
    %v329 = vld [vmem:[#allocation7 + $0x360] sm:$0xff]
    %v330 = vld [vmem:[#allocation7 + $0x368] sm:$0xff]
    %v331 = vld [vmem:[#allocation7 + $0x370] sm:$0xff]
    %v332 = vld [vmem:[#allocation7 + $0x378] sm:$0xff]
    %v333 = vld [vmem:[#allocation7 + $0x380] sm:$0xff]
    %v334 = vld [vmem:[#allocation7 + $0x388] sm:$0xff]
    %v335 = vld [vmem:[#allocation7 + $0x390] sm:$0xff]
    %v336 = vld [vmem:[#allocation7 + $0x398] sm:$0xff]
    %v337 = vld [vmem:[#allocation7 + $0x3a0] sm:$0xff]
    %v338 = vld [vmem:[#allocation7 + $0x3a8] sm:$0xff]
    %v339 = vld [vmem:[#allocation7 + $0x3b0] sm:$0xff]
    %v340 = vld [vmem:[#allocation7 + $0x3b8] sm:$0xff]
    %v341 = vld [vmem:[#allocation7 + $0x3c0] sm:$0xff]
    %v342 = vld [vmem:[#allocation7 + $0x3c8] sm:$0xff]
    %v343 = vld [vmem:[#allocation7 + $0x3d0] sm:$0xff]
    %v344 = vld [vmem:[#allocation7 + $0x3d8] sm:$0xff]
    %v345 = vld [vmem:[#allocation7 + $0x3e0] sm:$0xff]
    %v346 = vld [vmem:[#allocation7 + $0x3e8] sm:$0xff]
    %v347 = vld [vmem:[#allocation7 + $0x3f0] sm:$0xff]
    %v348 = vld [vmem:[#allocation7 + $0x3f8] sm:$0xff]
    %v349 = vld [vmem:[%s4] sm:$0xf]
    %v351 = vlaneseq
    %v352 = vshrl.u32 %v351, 7
    %v353 = vsub.s32 0, %v352
    %v354 = vrot.slane %v349, %v353
    %v355 = vlaneseq
    %v356 = vshrl.u32 %v355, 7
    %v357 = vsub.s32 1, %v356
    %v358 = vrot.slane %v349, %v357
    %v359 = vlaneseq
    %v360 = vshrl.u32 %v359, 7
    %v361 = vsub.s32 2, %v360
    %v362 = vrot.slane %v349, %v361
    %v363 = vlaneseq
    %v364 = vshrl.u32 %v363, 7
    %v365 = vsub.s32 3, %v364
    %v366 = vrot.slane %v349, %v365
    %v499 = vunpack.c.l.b16 %v221
    %v500 = vunpack.c.h.b16 %v221
    %v501 = vunpack.c.l.b16 %v222
    %v502 = vunpack.c.h.b16 %v222
    %v503 = vunpack.c.l.b16 %v223
    %v504 = vunpack.c.h.b16 %v223
    %v505 = vunpack.c.l.b16 %v224
    %v506 = vunpack.c.h.b16 %v224
    %v507 = vunpack.c.l.b16 %v225
    %v508 = vunpack.c.h.b16 %v225
    %v509 = vunpack.c.l.b16 %v226
    %v510 = vunpack.c.h.b16 %v226
    %v511 = vunpack.c.l.b16 %v227
    %v512 = vunpack.c.h.b16 %v227
    %v513 = vunpack.c.l.b16 %v228
    %v514 = vunpack.c.h.b16 %v228
    %v515 = vunpack.c.l.b16 %v229
    %v516 = vunpack.c.h.b16 %v229
    %v517 = vunpack.c.l.b16 %v230
    %v518 = vunpack.c.h.b16 %v230
    %v519 = vunpack.c.l.b16 %v231
    %v520 = vunpack.c.h.b16 %v231
    %v521 = vunpack.c.l.b16 %v232
    %v522 = vunpack.c.h.b16 %v232
    %v523 = vunpack.c.l.b16 %v233
    %v524 = vunpack.c.h.b16 %v233
    %v525 = vunpack.c.l.b16 %v234
    %v526 = vunpack.c.h.b16 %v234
    %v527 = vunpack.c.l.b16 %v235
    %v528 = vunpack.c.h.b16 %v235
    %v529 = vunpack.c.l.b16 %v236
    %v530 = vunpack.c.h.b16 %v236
    %v531 = vunpack.c.l.b16 %v237
    %v532 = vunpack.c.h.b16 %v237
    %v533 = vunpack.c.l.b16 %v238
    %v534 = vunpack.c.h.b16 %v238
    %v535 = vunpack.c.l.b16 %v239
    %v536 = vunpack.c.h.b16 %v239
    %v537 = vunpack.c.l.b16 %v240
    %v538 = vunpack.c.h.b16 %v240
    %v539 = vunpack.c.l.b16 %v241
    %v540 = vunpack.c.h.b16 %v241
    %v541 = vunpack.c.l.b16 %v242
    %v542 = vunpack.c.h.b16 %v242
    %v543 = vunpack.c.l.b16 %v243
    %v544 = vunpack.c.h.b16 %v243
    %v545 = vunpack.c.l.b16 %v244
    %v546 = vunpack.c.h.b16 %v244
    %v547 = vunpack.c.l.b16 %v245
    %v548 = vunpack.c.h.b16 %v245
    %v549 = vunpack.c.l.b16 %v246
    %v550 = vunpack.c.h.b16 %v246
    %v551 = vunpack.c.l.b16 %v247
    %v552 = vunpack.c.h.b16 %v247
    %v553 = vunpack.c.l.b16 %v248
    %v554 = vunpack.c.h.b16 %v248
    %v555 = vunpack.c.l.b16 %v249
    %v556 = vunpack.c.h.b16 %v249
    %v557 = vunpack.c.l.b16 %v250
    %v558 = vunpack.c.h.b16 %v250
    %v559 = vunpack.c.l.b16 %v251
    %v560 = vunpack.c.h.b16 %v251
    %v561 = vunpack.c.l.b16 %v252
    %v562 = vunpack.c.h.b16 %v252
    %v563 = vunpack.c.l.b16 %v253
    %v564 = vunpack.c.h.b16 %v253
    %v565 = vunpack.c.l.b16 %v254
    %v566 = vunpack.c.h.b16 %v254
    %v567 = vunpack.c.l.b16 %v255
    %v568 = vunpack.c.h.b16 %v255
    %v569 = vunpack.c.l.b16 %v256
    %v570 = vunpack.c.h.b16 %v256
    %v571 = vunpack.c.l.b16 %v257
    %v572 = vunpack.c.h.b16 %v257
    %v573 = vunpack.c.l.b16 %v258
    %v574 = vunpack.c.h.b16 %v258
    %v575 = vunpack.c.l.b16 %v259
    %v576 = vunpack.c.h.b16 %v259
    %v577 = vunpack.c.l.b16 %v260
    %v578 = vunpack.c.h.b16 %v260
    %v579 = vunpack.c.l.b16 %v261
    %v580 = vunpack.c.h.b16 %v261
    %v581 = vunpack.c.l.b16 %v262
    %v582 = vunpack.c.h.b16 %v262
    %v583 = vunpack.c.l.b16 %v263
    %v584 = vunpack.c.h.b16 %v263
    %v585 = vunpack.c.l.b16 %v264
    %v586 = vunpack.c.h.b16 %v264
    %v587 = vunpack.c.l.b16 %v265
    %v588 = vunpack.c.h.b16 %v265
    %v589 = vunpack.c.l.b16 %v266
    %v590 = vunpack.c.h.b16 %v266
    %v591 = vunpack.c.l.b16 %v267
    %v592 = vunpack.c.h.b16 %v267
    %v593 = vunpack.c.l.b16 %v268
    %v594 = vunpack.c.h.b16 %v268
    %v595 = vunpack.c.l.b16 %v269
    %v596 = vunpack.c.h.b16 %v269
    %v597 = vunpack.c.l.b16 %v270
    %v598 = vunpack.c.h.b16 %v270
    %v599 = vunpack.c.l.b16 %v271
    %v600 = vunpack.c.h.b16 %v271
    %v601 = vunpack.c.l.b16 %v272
    %v602 = vunpack.c.h.b16 %v272
    %v603 = vunpack.c.l.b16 %v273
    %v604 = vunpack.c.h.b16 %v273
    %v605 = vunpack.c.l.b16 %v274
    %v606 = vunpack.c.h.b16 %v274
    %v607 = vunpack.c.l.b16 %v275
    %v608 = vunpack.c.h.b16 %v275
    %v609 = vunpack.c.l.b16 %v276
    %v610 = vunpack.c.h.b16 %v276
    %v611 = vunpack.c.l.b16 %v277
    %v612 = vunpack.c.h.b16 %v277
    %v613 = vunpack.c.l.b16 %v278
    %v614 = vunpack.c.h.b16 %v278
    %v615 = vunpack.c.l.b16 %v279
    %v616 = vunpack.c.h.b16 %v279
    %v617 = vunpack.c.l.b16 %v280
    %v618 = vunpack.c.h.b16 %v280
    %v619 = vunpack.c.l.b16 %v281
    %v620 = vunpack.c.h.b16 %v281
    %v621 = vunpack.c.l.b16 %v282
    %v622 = vunpack.c.h.b16 %v282
    %v623 = vunpack.c.l.b16 %v283
    %v624 = vunpack.c.h.b16 %v283
    %v625 = vunpack.c.l.b16 %v284
    %v626 = vunpack.c.h.b16 %v284
    %v627 = vunpack.c.l.b16 %v285
    %v628 = vunpack.c.h.b16 %v285
    %v629 = vunpack.c.l.b16 %v286
    %v630 = vunpack.c.h.b16 %v286
    %v631 = vunpack.c.l.b16 %v287
    %v632 = vunpack.c.h.b16 %v287
    %v633 = vunpack.c.l.b16 %v288
    %v634 = vunpack.c.h.b16 %v288
    %v635 = vunpack.c.l.b16 %v289
    %v636 = vunpack.c.h.b16 %v289
    %v637 = vunpack.c.l.b16 %v290
    %v638 = vunpack.c.h.b16 %v290
    %v639 = vunpack.c.l.b16 %v291
    %v640 = vunpack.c.h.b16 %v291
    %v641 = vunpack.c.l.b16 %v292
    %v642 = vunpack.c.h.b16 %v292
    %v643 = vunpack.c.l.b16 %v293
    %v644 = vunpack.c.h.b16 %v293
    %v645 = vunpack.c.l.b16 %v294
    %v646 = vunpack.c.h.b16 %v294
    %v647 = vunpack.c.l.b16 %v295
    %v648 = vunpack.c.h.b16 %v295
    %v649 = vunpack.c.l.b16 %v296
    %v650 = vunpack.c.h.b16 %v296
    %v651 = vunpack.c.l.b16 %v297
    %v652 = vunpack.c.h.b16 %v297
    %v653 = vunpack.c.l.b16 %v298
    %v654 = vunpack.c.h.b16 %v298
    %v655 = vunpack.c.l.b16 %v299
    %v656 = vunpack.c.h.b16 %v299
    %v657 = vunpack.c.l.b16 %v300
    %v658 = vunpack.c.h.b16 %v300
    %v659 = vunpack.c.l.b16 %v301
    %v660 = vunpack.c.h.b16 %v301
    %v661 = vunpack.c.l.b16 %v302
    %v662 = vunpack.c.h.b16 %v302
    %v663 = vunpack.c.l.b16 %v303
    %v664 = vunpack.c.h.b16 %v303
    %v665 = vunpack.c.l.b16 %v304
    %v666 = vunpack.c.h.b16 %v304
    %v667 = vunpack.c.l.b16 %v305
    %v668 = vunpack.c.h.b16 %v305
    %v669 = vunpack.c.l.b16 %v306
    %v670 = vunpack.c.h.b16 %v306
    %v671 = vunpack.c.l.b16 %v307
    %v672 = vunpack.c.h.b16 %v307
    %v673 = vunpack.c.l.b16 %v308
    %v674 = vunpack.c.h.b16 %v308
    %v675 = vunpack.c.l.b16 %v309
    %v676 = vunpack.c.h.b16 %v309
    %v677 = vunpack.c.l.b16 %v310
    %v678 = vunpack.c.h.b16 %v310
    %v679 = vunpack.c.l.b16 %v311
    %v680 = vunpack.c.h.b16 %v311
    %v681 = vunpack.c.l.b16 %v312
    %v682 = vunpack.c.h.b16 %v312
    %v683 = vunpack.c.l.b16 %v313
    %v684 = vunpack.c.h.b16 %v313
    %v685 = vunpack.c.l.b16 %v314
    %v686 = vunpack.c.h.b16 %v314
    %v687 = vunpack.c.l.b16 %v315
    %v688 = vunpack.c.h.b16 %v315
    %v689 = vunpack.c.l.b16 %v316
    %v690 = vunpack.c.h.b16 %v316
    %v691 = vunpack.c.l.b16 %v317
    %v692 = vunpack.c.h.b16 %v317
    %v693 = vunpack.c.l.b16 %v318
    %v694 = vunpack.c.h.b16 %v318
    %v695 = vunpack.c.l.b16 %v319
    %v696 = vunpack.c.h.b16 %v319
    %v697 = vunpack.c.l.b16 %v320
    %v698 = vunpack.c.h.b16 %v320
    %v699 = vunpack.c.l.b16 %v321
    %v700 = vunpack.c.h.b16 %v321
    %v701 = vunpack.c.l.b16 %v322
    %v702 = vunpack.c.h.b16 %v322
    %v703 = vunpack.c.l.b16 %v323
    %v704 = vunpack.c.h.b16 %v323
    %v705 = vunpack.c.l.b16 %v324
    %v706 = vunpack.c.h.b16 %v324
    %v707 = vunpack.c.l.b16 %v325
    %v708 = vunpack.c.h.b16 %v325
    %v709 = vunpack.c.l.b16 %v326
    %v710 = vunpack.c.h.b16 %v326
    %v711 = vunpack.c.l.b16 %v327
    %v712 = vunpack.c.h.b16 %v327
    %v713 = vunpack.c.l.b16 %v328
    %v714 = vunpack.c.h.b16 %v328
    %v715 = vunpack.c.l.b16 %v329
    %v716 = vunpack.c.h.b16 %v329
    %v717 = vunpack.c.l.b16 %v330
    %v718 = vunpack.c.h.b16 %v330
    %v719 = vunpack.c.l.b16 %v331
    %v720 = vunpack.c.h.b16 %v331
    %v721 = vunpack.c.l.b16 %v332
    %v722 = vunpack.c.h.b16 %v332
    %v723 = vunpack.c.l.b16 %v333
    %v724 = vunpack.c.h.b16 %v333
    %v725 = vunpack.c.l.b16 %v334
    %v726 = vunpack.c.h.b16 %v334
    %v727 = vunpack.c.l.b16 %v335
    %v728 = vunpack.c.h.b16 %v335
    %v729 = vunpack.c.l.b16 %v336
    %v730 = vunpack.c.h.b16 %v336
    %v731 = vunpack.c.l.b16 %v337
    %v732 = vunpack.c.h.b16 %v337
    %v733 = vunpack.c.l.b16 %v338
    %v734 = vunpack.c.h.b16 %v338
    %v735 = vunpack.c.l.b16 %v339
    %v736 = vunpack.c.h.b16 %v339
    %v737 = vunpack.c.l.b16 %v340
    %v738 = vunpack.c.h.b16 %v340
    %v739 = vunpack.c.l.b16 %v341
    %v740 = vunpack.c.h.b16 %v341
    %v741 = vunpack.c.l.b16 %v342
    %v742 = vunpack.c.h.b16 %v342
    %v743 = vunpack.c.l.b16 %v343
    %v744 = vunpack.c.h.b16 %v343
    %v745 = vunpack.c.l.b16 %v344
    %v746 = vunpack.c.h.b16 %v344
    %v747 = vunpack.c.l.b16 %v345
    %v748 = vunpack.c.h.b16 %v345
    %v749 = vunpack.c.l.b16 %v346
    %v750 = vunpack.c.h.b16 %v346
    %v751 = vunpack.c.l.b16 %v347
    %v752 = vunpack.c.h.b16 %v347
    %v753 = vunpack.c.l.b16 %v348
    %v754 = vunpack.c.h.b16 %v348
    %v755 = vpack.c.b16 %v503, %v499
    %v756 = vpack.c.b16 %v504, %v500
    %v757 = vpack.c.b16 %v505, %v501
    %v758 = vpack.c.b16 %v506, %v502
    %v759 = vpack.c.b16 %v511, %v507
    %v760 = vpack.c.b16 %v512, %v508
    %v761 = vpack.c.b16 %v513, %v509
    %v762 = vpack.c.b16 %v514, %v510
    %v763 = vpack.c.b16 %v519, %v515
    %v764 = vpack.c.b16 %v520, %v516
    %v765 = vpack.c.b16 %v521, %v517
    %v766 = vpack.c.b16 %v522, %v518
    %v767 = vpack.c.b16 %v527, %v523
    %v768 = vpack.c.b16 %v528, %v524
    %v769 = vpack.c.b16 %v529, %v525
    %v770 = vpack.c.b16 %v530, %v526
    %v771 = vpack.c.b16 %v535, %v531
    %v772 = vpack.c.b16 %v536, %v532
    %v773 = vpack.c.b16 %v537, %v533
    %v774 = vpack.c.b16 %v538, %v534
    %v775 = vpack.c.b16 %v543, %v539
    %v776 = vpack.c.b16 %v544, %v540
    %v777 = vpack.c.b16 %v545, %v541
    %v778 = vpack.c.b16 %v546, %v542
    %v779 = vpack.c.b16 %v551, %v547
    %v780 = vpack.c.b16 %v552, %v548
    %v781 = vpack.c.b16 %v553, %v549
    %v782 = vpack.c.b16 %v554, %v550
    %v783 = vpack.c.b16 %v559, %v555
    %v784 = vpack.c.b16 %v560, %v556
    %v785 = vpack.c.b16 %v561, %v557
    %v786 = vpack.c.b16 %v562, %v558
    %v787 = vpack.c.b16 %v567, %v563
    %v788 = vpack.c.b16 %v568, %v564
    %v789 = vpack.c.b16 %v569, %v565
    %v790 = vpack.c.b16 %v570, %v566
    %v791 = vpack.c.b16 %v575, %v571
    %v792 = vpack.c.b16 %v576, %v572
    %v793 = vpack.c.b16 %v577, %v573
    %v794 = vpack.c.b16 %v578, %v574
    %v795 = vpack.c.b16 %v583, %v579
    %v796 = vpack.c.b16 %v584, %v580
    %v797 = vpack.c.b16 %v585, %v581
    %v798 = vpack.c.b16 %v586, %v582
    %v799 = vpack.c.b16 %v591, %v587
    %v800 = vpack.c.b16 %v592, %v588
    %v801 = vpack.c.b16 %v593, %v589
    %v802 = vpack.c.b16 %v594, %v590
    %v803 = vpack.c.b16 %v599, %v595
    %v804 = vpack.c.b16 %v600, %v596
    %v805 = vpack.c.b16 %v601, %v597
    %v806 = vpack.c.b16 %v602, %v598
    %v807 = vpack.c.b16 %v607, %v603
    %v808 = vpack.c.b16 %v608, %v604
    %v809 = vpack.c.b16 %v609, %v605
    %v810 = vpack.c.b16 %v610, %v606
    %v811 = vpack.c.b16 %v615, %v611
    %v812 = vpack.c.b16 %v616, %v612
    %v813 = vpack.c.b16 %v617, %v613
    %v814 = vpack.c.b16 %v618, %v614
    %v815 = vpack.c.b16 %v623, %v619
    %v816 = vpack.c.b16 %v624, %v620
    %v817 = vpack.c.b16 %v625, %v621
    %v818 = vpack.c.b16 %v626, %v622
    %v819 = vpack.c.b16 %v631, %v627
    %v820 = vpack.c.b16 %v632, %v628
    %v821 = vpack.c.b16 %v633, %v629
    %v822 = vpack.c.b16 %v634, %v630
    %v823 = vpack.c.b16 %v639, %v635
    %v824 = vpack.c.b16 %v640, %v636
    %v825 = vpack.c.b16 %v641, %v637
    %v826 = vpack.c.b16 %v642, %v638
    %v827 = vpack.c.b16 %v647, %v643
    %v828 = vpack.c.b16 %v648, %v644
    %v829 = vpack.c.b16 %v649, %v645
    %v830 = vpack.c.b16 %v650, %v646
    %v831 = vpack.c.b16 %v655, %v651
    %v832 = vpack.c.b16 %v656, %v652
    %v833 = vpack.c.b16 %v657, %v653
    %v834 = vpack.c.b16 %v658, %v654
    %v835 = vpack.c.b16 %v663, %v659
    %v836 = vpack.c.b16 %v664, %v660
    %v837 = vpack.c.b16 %v665, %v661
    %v838 = vpack.c.b16 %v666, %v662
    %v839 = vpack.c.b16 %v671, %v667
    %v840 = vpack.c.b16 %v672, %v668
    %v841 = vpack.c.b16 %v673, %v669
    %v842 = vpack.c.b16 %v674, %v670
    %v843 = vpack.c.b16 %v679, %v675
    %v844 = vpack.c.b16 %v680, %v676
    %v845 = vpack.c.b16 %v681, %v677
    %v846 = vpack.c.b16 %v682, %v678
    %v847 = vpack.c.b16 %v687, %v683
    %v848 = vpack.c.b16 %v688, %v684
    %v849 = vpack.c.b16 %v689, %v685
    %v850 = vpack.c.b16 %v690, %v686
    %v851 = vpack.c.b16 %v695, %v691
    %v852 = vpack.c.b16 %v696, %v692
    %v853 = vpack.c.b16 %v697, %v693
    %v854 = vpack.c.b16 %v698, %v694
    %v855 = vpack.c.b16 %v703, %v699
    %v856 = vpack.c.b16 %v704, %v700
    %v857 = vpack.c.b16 %v705, %v701
    %v858 = vpack.c.b16 %v706, %v702
    %v859 = vpack.c.b16 %v711, %v707
    %v860 = vpack.c.b16 %v712, %v708
    %v861 = vpack.c.b16 %v713, %v709
    %v862 = vpack.c.b16 %v714, %v710
    %v863 = vpack.c.b16 %v719, %v715
    %v864 = vpack.c.b16 %v720, %v716
    %v865 = vpack.c.b16 %v721, %v717
    %v866 = vpack.c.b16 %v722, %v718
    %v867 = vpack.c.b16 %v727, %v723
    %v868 = vpack.c.b16 %v728, %v724
    %v869 = vpack.c.b16 %v729, %v725
    %v870 = vpack.c.b16 %v730, %v726
    %v871 = vpack.c.b16 %v735, %v731
    %v872 = vpack.c.b16 %v736, %v732
    %v873 = vpack.c.b16 %v737, %v733
    %v874 = vpack.c.b16 %v738, %v734
    %v875 = vpack.c.b16 %v743, %v739
    %v876 = vpack.c.b16 %v744, %v740
    %v877 = vpack.c.b16 %v745, %v741
    %v878 = vpack.c.b16 %v746, %v742
    %v879 = vpack.c.b16 %v751, %v747
    %v880 = vpack.c.b16 %v752, %v748
    %v881 = vpack.c.b16 %v753, %v749
    %v882 = vpack.c.b16 %v754, %v750
    %1011 = vmatprep.subr.bf16.mxu0 %v756
    %1012 = vmatpush1.bf16.msra.mxu0 %v755
    %1013 = vmatprep.subr.bf16.mxu0 %v760
    %1014 = vmatpush1.bf16.msra.mxu0 %v759
    %1015 = vmatprep.subr.bf16.mxu0 %v764
    %1016 = vmatpush1.bf16.msra.mxu0 %v763
    %1017 = vmatprep.subr.bf16.mxu0 %v768
    %1018 = vmatpush1.bf16.msra.mxu0 %v767
    %1019 = vmatprep.subr.bf16.mxu0 %v772
    %1020 = vmatpush1.bf16.msra.mxu0 %v771
    %1021 = vmatprep.subr.bf16.mxu0 %v776
    %1022 = vmatpush1.bf16.msra.mxu0 %v775
    %1023 = vmatprep.subr.bf16.mxu0 %v780
    %1024 = vmatpush1.bf16.msra.mxu0 %v779
    %1025 = vmatprep.subr.bf16.mxu0 %v784
    %1026 = vmatpush1.bf16.msra.mxu0 %v783
    %1027 = vmatprep.subr.bf16.mxu0 %v788
    %1028 = vmatpush1.bf16.msra.mxu0 %v787
    %1029 = vmatprep.subr.bf16.mxu0 %v792
    %1030 = vmatpush1.bf16.msra.mxu0 %v791
    %1031 = vmatprep.subr.bf16.mxu0 %v796
    %1032 = vmatpush1.bf16.msra.mxu0 %v795
    %1033 = vmatprep.subr.bf16.mxu0 %v800
    %1034 = vmatpush1.bf16.msra.mxu0 %v799
    %1035 = vmatprep.subr.bf16.mxu0 %v804
    %1036 = vmatpush1.bf16.msra.mxu0 %v803
    %1037 = vmatprep.subr.bf16.mxu0 %v808
    %1038 = vmatpush1.bf16.msra.mxu0 %v807
    %1039 = vmatprep.subr.bf16.mxu0 %v812
    %1040 = vmatpush1.bf16.msra.mxu0 %v811
    %1041 = vmatprep.subr.bf16.mxu0 %v816
    %1042 = vmatpush1.bf16.msra.mxu0 %v815
    %1043 = vmatprep.mubr.bf16.mxu0 %v218
    %1044 = vmatmul.mubr.bf16.gmra.mrb[0].mxu0 %v217
    %v1045 = vpop.f32.mrb[0].mxu0
    %v1046 = vadd.f32 %v354, %v1045
    %v1047 = vpop.f32.mrb[0].mxu0
    %v1048 = vadd.f32 %v358, %v1047
    %v1049 = vpop.f32.mrb[0].mxu0
    %v1050 = vpop.f32.mrb[0].mxu0
    %1051 = vdwg.mxu0
    %1052 = vmatprep.subr.bf16.mxu0 %v820
    %1053 = vmatpush1.bf16.msra.mxu0 %v819
    %1054 = vmatprep.subr.bf16.mxu0 %v824
    %1055 = vmatpush1.bf16.msra.mxu0 %v823
    %1056 = vmatprep.subr.bf16.mxu0 %v828
    %1057 = vmatpush1.bf16.msra.mxu0 %v827
    %1058 = vmatprep.subr.bf16.mxu0 %v832
    %1059 = vmatpush1.bf16.msra.mxu0 %v831
    %1060 = vmatprep.subr.bf16.mxu0 %v836
    %1061 = vmatpush1.bf16.msra.mxu0 %v835
    %1062 = vmatprep.subr.bf16.mxu0 %v840
    %1063 = vmatpush1.bf16.msra.mxu0 %v839
    %1064 = vmatprep.subr.bf16.mxu0 %v844
    %1065 = vmatpush1.bf16.msra.mxu0 %v843
    %1066 = vmatprep.subr.bf16.mxu0 %v848
    %1067 = vmatpush1.bf16.msra.mxu0 %v847
    %1068 = vmatprep.subr.bf16.mxu0 %v852
    %1069 = vmatpush1.bf16.msra.mxu0 %v851
    %1070 = vmatprep.subr.bf16.mxu0 %v856
    %1071 = vmatpush1.bf16.msra.mxu0 %v855
    %1072 = vmatprep.subr.bf16.mxu0 %v860
    %1073 = vmatpush1.bf16.msra.mxu0 %v859
    %1074 = vmatprep.subr.bf16.mxu0 %v864
    %1075 = vmatpush1.bf16.msra.mxu0 %v863
    %1076 = vmatprep.subr.bf16.mxu0 %v868
    %1077 = vmatpush1.bf16.msra.mxu0 %v867
    %1078 = vmatprep.subr.bf16.mxu0 %v872
    %1079 = vmatpush1.bf16.msra.mxu0 %v871
    %1080 = vmatprep.subr.bf16.mxu0 %v876
    %1081 = vmatpush1.bf16.msra.mxu0 %v875
    %1082 = vmatprep.subr.bf16.mxu0 %v880
    %1083 = vmatpush1.bf16.msra.mxu0 %v879
    %1084 = vmatprep.mubr.bf16.mxu0 %v220
    %1085 = vmatmul.mubr.bf16.gmra.mrb[0].mxu0 %v219
    %v1086 = vpop.f32.mrb[0].mxu0
    %v1087 = vadd.f32 %v1046, %v1086
    %v1088 = vpop.f32.mrb[0].mxu0
    %v1089 = vadd.f32 %v1048, %v1088
    %v1090 = vpop.f32.mrb[0].mxu0
    %v1091 = vpop.f32.mrb[0].mxu0
    %1092 = vdwg.mxu0
    %1093 = vmatprep.subr.bf16.mxu0 %v758
    %1094 = vmatpush1.bf16.msra.mxu0 %v757
    %1095 = vmatprep.subr.bf16.mxu0 %v762
    %1096 = vmatpush1.bf16.msra.mxu0 %v761
    %1097 = vmatprep.subr.bf16.mxu0 %v766
    %1098 = vmatpush1.bf16.msra.mxu0 %v765
    %1099 = vmatprep.subr.bf16.mxu0 %v770
    %1100 = vmatpush1.bf16.msra.mxu0 %v769
    %1101 = vmatprep.subr.bf16.mxu0 %v774
    %1102 = vmatpush1.bf16.msra.mxu0 %v773
    %1103 = vmatprep.subr.bf16.mxu0 %v778
    %1104 = vmatpush1.bf16.msra.mxu0 %v777
    %1105 = vmatprep.subr.bf16.mxu0 %v782
    %1106 = vmatpush1.bf16.msra.mxu0 %v781
    %1107 = vmatprep.subr.bf16.mxu0 %v786
    %1108 = vmatpush1.bf16.msra.mxu0 %v785
    %1109 = vmatprep.subr.bf16.mxu0 %v790
    %1110 = vmatpush1.bf16.msra.mxu0 %v789
    %1111 = vmatprep.subr.bf16.mxu0 %v794
    %1112 = vmatpush1.bf16.msra.mxu0 %v793
    %1113 = vmatprep.subr.bf16.mxu0 %v798
    %1114 = vmatpush1.bf16.msra.mxu0 %v797
    %1115 = vmatprep.subr.bf16.mxu0 %v802
    %1116 = vmatpush1.bf16.msra.mxu0 %v801
    %1117 = vmatprep.subr.bf16.mxu0 %v806
    %1118 = vmatpush1.bf16.msra.mxu0 %v805
    %1119 = vmatprep.subr.bf16.mxu0 %v810
    %1120 = vmatpush1.bf16.msra.mxu0 %v809
    %1121 = vmatprep.subr.bf16.mxu0 %v814
    %1122 = vmatpush1.bf16.msra.mxu0 %v813
    %1123 = vmatprep.subr.bf16.mxu0 %v818
    %1124 = vmatpush1.bf16.msra.mxu0 %v817
    %1125 = vmatprep.mubr.bf16.mxu0 %v218
    %1126 = vmatmul.mubr.bf16.gmra.mrb[0].mxu0 %v217
    %v1127 = vpop.f32.mrb[0].mxu0
    %v1128 = vadd.f32 %v362, %v1127
    %v1129 = vpop.f32.mrb[0].mxu0
    %v1130 = vadd.f32 %v366, %v1129
    %v1131 = vpop.f32.mrb[0].mxu0
    %v1132 = vpop.f32.mrb[0].mxu0
    %1133 = vdwg.mxu0
    %1134 = vmatprep.subr.bf16.mxu0 %v822
    %1135 = vmatpush1.bf16.msra.mxu0 %v821
    %1136 = vmatprep.subr.bf16.mxu0 %v826
    %1137 = vmatpush1.bf16.msra.mxu0 %v825
    %1138 = vmatprep.subr.bf16.mxu0 %v830
    %1139 = vmatpush1.bf16.msra.mxu0 %v829
    %1140 = vmatprep.subr.bf16.mxu0 %v834
    %1141 = vmatpush1.bf16.msra.mxu0 %v833
    %1142 = vmatprep.subr.bf16.mxu0 %v838
    %1143 = vmatpush1.bf16.msra.mxu0 %v837
    %1144 = vmatprep.subr.bf16.mxu0 %v842
    %1145 = vmatpush1.bf16.msra.mxu0 %v841
    %1146 = vmatprep.subr.bf16.mxu0 %v846
    %1147 = vmatpush1.bf16.msra.mxu0 %v845
    %1148 = vmatprep.subr.bf16.mxu0 %v850
    %1149 = vmatpush1.bf16.msra.mxu0 %v849
    %1150 = vmatprep.subr.bf16.mxu0 %v854
    %1151 = vmatpush1.bf16.msra.mxu0 %v853
    %1152 = vmatprep.subr.bf16.mxu0 %v858
    %1153 = vmatpush1.bf16.msra.mxu0 %v857
    %1154 = vmatprep.subr.bf16.mxu0 %v862
    %1155 = vmatpush1.bf16.msra.mxu0 %v861
    %1156 = vmatprep.subr.bf16.mxu0 %v866
    %1157 = vmatpush1.bf16.msra.mxu0 %v865
    %1158 = vmatprep.subr.bf16.mxu0 %v870
    %1159 = vmatpush1.bf16.msra.mxu0 %v869
    %1160 = vmatprep.subr.bf16.mxu0 %v874
    %1161 = vmatpush1.bf16.msra.mxu0 %v873
    %1162 = vmatprep.subr.bf16.mxu0 %v878
    %1163 = vmatpush1.bf16.msra.mxu0 %v877
    %1164 = vmatprep.subr.bf16.mxu0 %v882
    %1165 = vmatpush1.bf16.msra.mxu0 %v881
    %1166 = vmatprep.mubr.bf16.mxu0 %v220
    %1167 = vmatmul.mubr.bf16.gmra.mrb[0].mxu0 %v219
    %v1168 = vpop.f32.mrb[0].mxu0
    %v1169 = vadd.f32 %v1128, %v1168
    %v1170 = vpop.f32.mrb[0].mxu0
    %v1171 = vadd.f32 %v1130, %v1170
    %v1172 = vpop.f32.mrb[0].mxu0
    %v1173 = vpop.f32.mrb[0].mxu0
    %1174 = vdwg.mxu0
    %v1175 = vmax.f32 %v1087, 0.0
    %v1176 = vmax.f32 %v1089, 0.0
    %v1177 = vmax.f32 %v1169, 0.0
    %v1178 = vmax.f32 %v1171, 0.0
    %v1179 = vpack.c.bf16 %v1175, %v1175
    %v1180 = vpack.c.bf16 %v1176, %v1176
    %v1181 = vpack.c.bf16 %v1177, %v1177
    %v1182 = vpack.c.bf16 %v1178, %v1178
    %v1183 = vld [vmem:[#allocation8] sm:$0xf]
    %v1184 = vld [vmem:[#allocation8 + $0x4] sm:$0xf]
    %v1185 = vld [vmem:[#allocation8 + $0x8] sm:$0xf]
    %v1186 = vld [vmem:[#allocation8 + $0xc] sm:$0xf]
    %v1187 = vld [vmem:[#allocation8 + $0x10] sm:$0xf]
    %v1188 = vld [vmem:[#allocation8 + $0x14] sm:$0xf]
    %v1189 = vld [vmem:[#allocation8 + $0x18] sm:$0xf]
    %v1190 = vld [vmem:[#allocation8 + $0x1c] sm:$0xf]
    %v1191 = vld [vmem:[#allocation8 + $0x20] sm:$0xf]
    %v1192 = vld [vmem:[#allocation8 + $0x24] sm:$0xf]
    %v1193 = vld [vmem:[#allocation8 + $0x28] sm:$0xf]
    %v1194 = vld [vmem:[#allocation8 + $0x2c] sm:$0xf]
    %v1195 = vld [vmem:[#allocation8 + $0x30] sm:$0xf]
    %v1196 = vld [vmem:[#allocation8 + $0x34] sm:$0xf]
    %v1197 = vld [vmem:[#allocation8 + $0x38] sm:$0xf]
    %v1198 = vld [vmem:[#allocation8 + $0x3c] sm:$0xf]
    %v1199 = vld [vmem:[#allocation8 + $0x40] sm:$0xf]
    %v1200 = vld [vmem:[#allocation8 + $0x44] sm:$0xf]
    %v1201 = vld [vmem:[#allocation8 + $0x48] sm:$0xf]
    %v1202 = vld [vmem:[#allocation8 + $0x4c] sm:$0xf]
    %v1203 = vld [vmem:[#allocation8 + $0x50] sm:$0xf]
    %v1204 = vld [vmem:[#allocation8 + $0x54] sm:$0xf]
    %v1205 = vld [vmem:[#allocation8 + $0x58] sm:$0xf]
    %v1206 = vld [vmem:[#allocation8 + $0x5c] sm:$0xf]
    %v1207 = vld [vmem:[#allocation8 + $0x60] sm:$0xf]
    %v1208 = vld [vmem:[#allocation8 + $0x64] sm:$0xf]
    %v1209 = vld [vmem:[#allocation8 + $0x68] sm:$0xf]
    %v1210 = vld [vmem:[#allocation8 + $0x6c] sm:$0xf]
    %v1211 = vld [vmem:[#allocation8 + $0x70] sm:$0xf]
    %v1212 = vld [vmem:[#allocation8 + $0x74] sm:$0xf]
    %v1213 = vld [vmem:[#allocation8 + $0x78] sm:$0xf]
    %v1214 = vld [vmem:[#allocation8 + $0x7c] sm:$0xf]
    %v1215 = vld [vmem:[#allocation8 + $0x80] sm:$0xf]
    %v1216 = vld [vmem:[#allocation8 + $0x84] sm:$0xf]
    %v1217 = vld [vmem:[#allocation8 + $0x88] sm:$0xf]
    %v1218 = vld [vmem:[#allocation8 + $0x8c] sm:$0xf]
    %v1219 = vld [vmem:[#allocation8 + $0x90] sm:$0xf]
    %v1220 = vld [vmem:[#allocation8 + $0x94] sm:$0xf]
    %v1221 = vld [vmem:[#allocation8 + $0x98] sm:$0xf]
    %v1222 = vld [vmem:[#allocation8 + $0x9c] sm:$0xf]
    %v1223 = vld [vmem:[#allocation8 + $0xa0] sm:$0xf]
    %v1224 = vld [vmem:[#allocation8 + $0xa4] sm:$0xf]
    %v1225 = vld [vmem:[#allocation8 + $0xa8] sm:$0xf]
    %v1226 = vld [vmem:[#allocation8 + $0xac] sm:$0xf]
    %v1227 = vld [vmem:[#allocation8 + $0xb0] sm:$0xf]
    %v1228 = vld [vmem:[#allocation8 + $0xb4] sm:$0xf]
    %v1229 = vld [vmem:[#allocation8 + $0xb8] sm:$0xf]
    %v1230 = vld [vmem:[#allocation8 + $0xbc] sm:$0xf]
    %v1231 = vld [vmem:[#allocation8 + $0xc0] sm:$0xf]
    %v1232 = vld [vmem:[#allocation8 + $0xc4] sm:$0xf]
    %v1233 = vld [vmem:[#allocation8 + $0xc8] sm:$0xf]
    %v1234 = vld [vmem:[#allocation8 + $0xcc] sm:$0xf]
    %v1235 = vld [vmem:[#allocation8 + $0xd0] sm:$0xf]
    %v1236 = vld [vmem:[#allocation8 + $0xd4] sm:$0xf]
    %v1237 = vld [vmem:[#allocation8 + $0xd8] sm:$0xf]
    %v1238 = vld [vmem:[#allocation8 + $0xdc] sm:$0xf]
    %v1239 = vld [vmem:[#allocation8 + $0xe0] sm:$0xf]
    %v1240 = vld [vmem:[#allocation8 + $0xe4] sm:$0xf]
    %v1241 = vld [vmem:[#allocation8 + $0xe8] sm:$0xf]
    %v1242 = vld [vmem:[#allocation8 + $0xec] sm:$0xf]
    %v1243 = vld [vmem:[#allocation8 + $0xf0] sm:$0xf]
    %v1244 = vld [vmem:[#allocation8 + $0xf4] sm:$0xf]
    %v1245 = vld [vmem:[#allocation8 + $0xf8] sm:$0xf]
    %v1246 = vld [vmem:[#allocation8 + $0xfc] sm:$0xf]
    %v1247 = vld [vmem:[%s6] sm:$0x1]
    %v1249 = vlaneseq
    %v1250 = vshrl.u32 %v1249, 7
    %v1251 = vsub.s32 0, %v1250
    %v1252 = vrot.slane %v1247, %v1251
    %v1318 = vunpack.c.l.b16 %v1183
    %v1319 = vunpack.c.l.b16 %v1184
    %v1320 = vunpack.c.l.b16 %v1185
    %v1321 = vunpack.c.l.b16 %v1186
    %v1322 = vunpack.c.l.b16 %v1187
    %v1323 = vunpack.c.l.b16 %v1188
    %v1324 = vunpack.c.l.b16 %v1189
    %v1325 = vunpack.c.l.b16 %v1190
    %v1326 = vunpack.c.l.b16 %v1191
    %v1327 = vunpack.c.l.b16 %v1192
    %v1328 = vunpack.c.l.b16 %v1193
    %v1329 = vunpack.c.l.b16 %v1194
    %v1330 = vunpack.c.l.b16 %v1195
    %v1331 = vunpack.c.l.b16 %v1196
    %v1332 = vunpack.c.l.b16 %v1197
    %v1333 = vunpack.c.l.b16 %v1198
    %v1334 = vunpack.c.l.b16 %v1199
    %v1335 = vunpack.c.l.b16 %v1200
    %v1336 = vunpack.c.l.b16 %v1201
    %v1337 = vunpack.c.l.b16 %v1202
    %v1338 = vunpack.c.l.b16 %v1203
    %v1339 = vunpack.c.l.b16 %v1204
    %v1340 = vunpack.c.l.b16 %v1205
    %v1341 = vunpack.c.l.b16 %v1206
    %v1342 = vunpack.c.l.b16 %v1207
    %v1343 = vunpack.c.l.b16 %v1208
    %v1344 = vunpack.c.l.b16 %v1209
    %v1345 = vunpack.c.l.b16 %v1210
    %v1346 = vunpack.c.l.b16 %v1211
    %v1347 = vunpack.c.l.b16 %v1212
    %v1348 = vunpack.c.l.b16 %v1213
    %v1349 = vunpack.c.l.b16 %v1214
    %v1350 = vunpack.c.l.b16 %v1215
    %v1351 = vunpack.c.l.b16 %v1216
    %v1352 = vunpack.c.l.b16 %v1217
    %v1353 = vunpack.c.l.b16 %v1218
    %v1354 = vunpack.c.l.b16 %v1219
    %v1355 = vunpack.c.l.b16 %v1220
    %v1356 = vunpack.c.l.b16 %v1221
    %v1357 = vunpack.c.l.b16 %v1222
    %v1358 = vunpack.c.l.b16 %v1223
    %v1359 = vunpack.c.l.b16 %v1224
    %v1360 = vunpack.c.l.b16 %v1225
    %v1361 = vunpack.c.l.b16 %v1226
    %v1362 = vunpack.c.l.b16 %v1227
    %v1363 = vunpack.c.l.b16 %v1228
    %v1364 = vunpack.c.l.b16 %v1229
    %v1365 = vunpack.c.l.b16 %v1230
    %v1366 = vunpack.c.l.b16 %v1231
    %v1367 = vunpack.c.l.b16 %v1232
    %v1368 = vunpack.c.l.b16 %v1233
    %v1369 = vunpack.c.l.b16 %v1234
    %v1370 = vunpack.c.l.b16 %v1235
    %v1371 = vunpack.c.l.b16 %v1236
    %v1372 = vunpack.c.l.b16 %v1237
    %v1373 = vunpack.c.l.b16 %v1238
    %v1374 = vunpack.c.l.b16 %v1239
    %v1375 = vunpack.c.l.b16 %v1240
    %v1376 = vunpack.c.l.b16 %v1241
    %v1377 = vunpack.c.l.b16 %v1242
    %v1378 = vunpack.c.l.b16 %v1243
    %v1379 = vunpack.c.l.b16 %v1244
    %v1380 = vunpack.c.l.b16 %v1245
    %v1381 = vunpack.c.l.b16 %v1246
    %v1382 = vpack.c.b16 %v1319, %v1318
    %v1383 = vpack.c.b16 %v1321, %v1320
    %v1384 = vpack.c.b16 %v1323, %v1322
    %v1385 = vpack.c.b16 %v1325, %v1324
    %v1386 = vpack.c.b16 %v1327, %v1326
    %v1387 = vpack.c.b16 %v1329, %v1328
    %v1388 = vpack.c.b16 %v1331, %v1330
    %v1389 = vpack.c.b16 %v1333, %v1332
    %v1390 = vpack.c.b16 %v1335, %v1334
    %v1391 = vpack.c.b16 %v1337, %v1336
    %v1392 = vpack.c.b16 %v1339, %v1338
    %v1393 = vpack.c.b16 %v1341, %v1340
    %v1394 = vpack.c.b16 %v1343, %v1342
    %v1395 = vpack.c.b16 %v1345, %v1344
    %v1396 = vpack.c.b16 %v1347, %v1346
    %v1397 = vpack.c.b16 %v1349, %v1348
    %v1398 = vpack.c.b16 %v1351, %v1350
    %v1399 = vpack.c.b16 %v1353, %v1352
    %v1400 = vpack.c.b16 %v1355, %v1354
    %v1401 = vpack.c.b16 %v1357, %v1356
    %v1402 = vpack.c.b16 %v1359, %v1358
    %v1403 = vpack.c.b16 %v1361, %v1360
    %v1404 = vpack.c.b16 %v1363, %v1362
    %v1405 = vpack.c.b16 %v1365, %v1364
    %v1406 = vpack.c.b16 %v1367, %v1366
    %v1407 = vpack.c.b16 %v1369, %v1368
    %v1408 = vpack.c.b16 %v1371, %v1370
    %v1409 = vpack.c.b16 %v1373, %v1372
    %v1410 = vpack.c.b16 %v1375, %v1374
    %v1411 = vpack.c.b16 %v1377, %v1376
    %v1412 = vpack.c.b16 %v1379, %v1378
    %v1413 = vpack.c.b16 %v1381, %v1380
    %1446 = vmatprep.subr.bf16.mxu0 0
    %1447 = vmatpush1.bf16.msra.mxu0 %v1382
    %1448 = vmatprep.subr.bf16.mxu0 0
    %1449 = vmatpush1.bf16.msra.mxu0 %v1383
    %1450 = vmatprep.subr.bf16.mxu0 0
    %1451 = vmatpush1.bf16.msra.mxu0 %v1384
    %1452 = vmatprep.subr.bf16.mxu0 0
    %1453 = vmatpush1.bf16.msra.mxu0 %v1385
    %1454 = vmatprep.subr.bf16.mxu0 0
    %1455 = vmatpush1.bf16.msra.mxu0 %v1386
    %1456 = vmatprep.subr.bf16.mxu0 0
    %1457 = vmatpush1.bf16.msra.mxu0 %v1387
    %1458 = vmatprep.subr.bf16.mxu0 0
    %1459 = vmatpush1.bf16.msra.mxu0 %v1388
    %1460 = vmatprep.subr.bf16.mxu0 0
    %1461 = vmatpush1.bf16.msra.mxu0 %v1389
    %1462 = vmatprep.subr.bf16.mxu0 0
    %1463 = vmatpush1.bf16.msra.mxu0 %v1390
    %1464 = vmatprep.subr.bf16.mxu0 0
    %1465 = vmatpush1.bf16.msra.mxu0 %v1391
    %1466 = vmatprep.subr.bf16.mxu0 0
    %1467 = vmatpush1.bf16.msra.mxu0 %v1392
    %1468 = vmatprep.subr.bf16.mxu0 0
    %1469 = vmatpush1.bf16.msra.mxu0 %v1393
    %1470 = vmatprep.subr.bf16.mxu0 0
    %1471 = vmatpush1.bf16.msra.mxu0 %v1394
    %1472 = vmatprep.subr.bf16.mxu0 0
    %1473 = vmatpush1.bf16.msra.mxu0 %v1395
    %1474 = vmatprep.subr.bf16.mxu0 0
    %1475 = vmatpush1.bf16.msra.mxu0 %v1396
    %1476 = vmatprep.subr.bf16.mxu0 0
    %1477 = vmatpush1.bf16.msra.mxu0 %v1397
    %1478 = vmatprep.mubr.bf16.mxu0 %v1180
    %1479 = vmatmul.mubr.bf16.gmra.mrb[0].mxu0 %v1179
    %v1480 = vpop.f32.mrb[0].mxu0
    %v1481 = vadd.f32 %v1252, %v1480
    %v1482 = vpop.f32.mrb[0].mxu0
    %v1483 = vpop.f32.mrb[0].mxu0
    %v1484 = vpop.f32.mrb[0].mxu0
    %1485 = vdwg.mxu0
    %1486 = vmatprep.subr.bf16.mxu0 0
    %1487 = vmatpush1.bf16.msra.mxu0 %v1398
    %1488 = vmatprep.subr.bf16.mxu0 0
    %1489 = vmatpush1.bf16.msra.mxu0 %v1399
    %1490 = vmatprep.subr.bf16.mxu0 0
    %1491 = vmatpush1.bf16.msra.mxu0 %v1400
    %1492 = vmatprep.subr.bf16.mxu0 0
    %1493 = vmatpush1.bf16.msra.mxu0 %v1401
    %1494 = vmatprep.subr.bf16.mxu0 0
    %1495 = vmatpush1.bf16.msra.mxu0 %v1402
    %1496 = vmatprep.subr.bf16.mxu0 0
    %1497 = vmatpush1.bf16.msra.mxu0 %v1403
    %1498 = vmatprep.subr.bf16.mxu0 0
    %1499 = vmatpush1.bf16.msra.mxu0 %v1404
    %1500 = vmatprep.subr.bf16.mxu0 0
    %1501 = vmatpush1.bf16.msra.mxu0 %v1405
    %1502 = vmatprep.subr.bf16.mxu0 0
    %1503 = vmatpush1.bf16.msra.mxu0 %v1406
    %1504 = vmatprep.subr.bf16.mxu0 0
    %1505 = vmatpush1.bf16.msra.mxu0 %v1407
    %1506 = vmatprep.subr.bf16.mxu0 0
    %1507 = vmatpush1.bf16.msra.mxu0 %v1408
    %1508 = vmatprep.subr.bf16.mxu0 0
    %1509 = vmatpush1.bf16.msra.mxu0 %v1409
    %1510 = vmatprep.subr.bf16.mxu0 0
    %1511 = vmatpush1.bf16.msra.mxu0 %v1410
    %1512 = vmatprep.subr.bf16.mxu0 0
    %1513 = vmatpush1.bf16.msra.mxu0 %v1411
    %1514 = vmatprep.subr.bf16.mxu0 0
    %1515 = vmatpush1.bf16.msra.mxu0 %v1412
    %1516 = vmatprep.subr.bf16.mxu0 0
    %1517 = vmatpush1.bf16.msra.mxu0 %v1413
    %1518 = vmatprep.mubr.bf16.mxu0 %v1182
    %1519 = vmatmul.mubr.bf16.gmra.mrb[0].mxu0 %v1181
    %v1520 = vpop.f32.mrb[0].mxu0
    %v1521 = vadd.f32 %v1481, %v1520
    %v1522 = vpop.f32.mrb[0].mxu0
    %v1523 = vpop.f32.mrb[0].mxu0
    %v1524 = vpop.f32.mrb[0].mxu0
    %1525 = vdwg.mxu0
    %1526 = vst [vmem:[#allocation10] sm:$0xff] %v1521
    // Predicated region
    $region46: #{tpu_custom_call.1} parent=1 // pred_check
      _
    $region47: #{tpu_custom_call.1} parent=1 // pred_check_branch
      %1528 = sbr.rel (0) target = $region49
    $region48: #{tpu_custom_call.1} parent=1 // pred_region
      %s1530 = ssub.s32 128, 128
      %1531 = vsyncadd [#allocation4], %s1530
      %s1533 = sshll.u32 [#allocation10], 4
      %s1534 = int_to_ptr.vmem [resolvable:$true] %s1533
      %1536 = dma.vmem_to_hbm [thread:$0]  %s1534, 128, %s7, [#allocation4]
    $region49: #{tpu_custom_call.1} parent=1 // pred_fallthru
      _
    // Predicated region
    $region50: #{tpu_custom_call.1} parent=1 // pred_check
      _
    $region51: #{tpu_custom_call.1} parent=1 // pred_check_branch
      %1538 = sbr.rel (0) target = $region53
    $region52: #{tpu_custom_call.1} parent=1 // pred_region
      %1539 = dma.done [#allocation4], 128
    $region53: #{tpu_custom_call.1} parent=1 // pred_fallthru
      _
    %1540 = vsyncpa [#allocation3], 1
    %1541 = vsyncpa [#allocation6], 1
    %1542 = vsyncpa [#allocation9], 1
    %1543 = vsyncpa [#allocation4], 1

</llo_original>
